<compile_context>
chip_gen: v7x
topology: tpu7x:2x2x1
jax: 0.10.0
libtpu: 0.0.40
codegen_flags: <defaults>
</compile_context>

<pallas_src>
import jax
import jax.numpy as jnp
from jax.experimental import pallas as pl
from jax.experimental.pallas import tpu as pltpu


def _cdiv(a, b):
    return (a + b - 1) // b


def _round_up(x, m):
    return ((x + m - 1) // m) * m


def _pale_mapping_kernel(x_ref, w_ref, b_ref, o_ref):
    # x_ref: [TM, D]  streamed batch tile (source dtype)
    # w_ref: [D, Dp]  pre-transposed [in, out] weight, VMEM-resident
    # b_ref: [1, Dp]  VMEM-resident
    # o_ref: [TM, Dp]
    y = jnp.dot(x_ref[...], w_ref[...], preferred_element_type=jnp.float32)
    y = y + b_ref[...].astype(jnp.float32)
    # F.normalize(dim=1): y / max(||y||, 1e-12) == y * rsqrt(max(||y||^2, 1e-24))
    sq = jnp.sum(y * y, axis=1, keepdims=True)
    inv_norm = jax.lax.rsqrt(jnp.maximum(sq, 1e-24))  # EUP, off the VALU path
    o_ref[...] = (y * inv_norm).astype(o_ref.dtype)


def pale_mapping_linear_forward(source_feats, weight, bias):
    """source_feats: [B, D]; weight: [D, D] (PyTorch out x in); bias: [D]."""
    B, D = source_feats.shape
    out_dtype = source_feats.dtype
    x_item = jnp.dtype(source_feats.dtype).itemsize
    w_item = jnp.dtype(weight.dtype).itemsize
    sub = {4: 8, 2: 16, 1: 32}.get(x_item, 8)     # dtype-native sublane multiple

    # Lane-dense output width; the contraction dim stays exactly D so x is
    # never padded (padding only touches weight/bias, a one-time cost).
    Dp = D if D % 128 == 0 else _round_up(D, 128)

    # One-time wrapper-side transpose ([out,in] -> [in,out]) + output-axis pad.
    # Zero-padded columns of W / b => padded output columns are exactly zero.
    w_t = jnp.transpose(weight)                    # [D(in), D(out)]
    b_r = bias.reshape(1, D)
    if Dp != D:
        w_t = jnp.pad(w_t, ((0, 0), (0, Dp - D)))
        b_r = jnp.pad(b_r, ((0, 0), (0, Dp - D)))

    # ---- tile-size selection -------------------------------------------------
    w_bytes = D * Dp * w_item
    b_bytes = Dp * jnp.dtype(bias.dtype).itemsize

    def _tile_bytes(tm):
        # double-buffered x and out tiles + an f32 temp for y / the epilogue
        return 2 * tm * D * x_item + 2 * tm * Dp * x_item + tm * Dp * 4

    if B <= 4 * sub:
        TM = B                                     # single full-batch tile
    else:
        # >=4 tiles (>=2 per TensorCore on v7x megacore), <=512 rows per tile,
        # sized so worst-case ragged waste is < one sublane group per tile.
        n_tiles = max(4, _cdiv(B, 512))
        TM = min(_round_up(_cdiv(B, n_tiles), sub), 512)

    # Keep the working set inside a budget that also holds on v7x (64 MiB
    # physical VMEM per TensorCore), shrinking the batch tile if necessary.
    VMEM_BUDGET = 40 * 1024 * 1024
    while TM > sub and w_bytes + b_bytes + _tile_bytes(TM) > VMEM_BUDGET:
        new_tm = max(sub, _round_up(TM // 2, sub))
        if new_tm == TM:
            break
        TM = new_tm

    grid = _cdiv(B, TM)   # ragged final tile handled by Pallas boundary masking

    try:
        phys_vmem = int(pltpu.get_tpu_info().vmem_capacity_bytes)
    except Exception:
        phys_vmem = 64 * 1024 * 1024               # conservative (v7x)
    vmem_cap = max(32 * 1024 * 1024, int(0.85 * phys_vmem))

    cost = pl.CostEstimate(
        flops=2 * B * D * Dp + 4 * B * Dp,
        transcendentals=B,                         # one rsqrt per row
        bytes_accessed=B * D * x_item + D * Dp * w_item + Dp * 4 + B * Dp * x_item,
    )

    def _build(single_buffer_resident):
        if single_buffer_resident:
            nbuf = 1
            w_spec = pl.BlockSpec((D, Dp), lambda i: (0, 0),
                                  pipeline_mode=pl.Buffered(1))
            b_spec = pl.BlockSpec((1, Dp), lambda i: (0, 0),
                                  pipeline_mode=pl.Buffered(1))
        else:
            nbuf = 2
            w_spec = pl.BlockSpec((D, Dp), lambda i: (0, 0))
            b_spec = pl.BlockSpec((1, Dp), lambda i: (0, 0))

        need = nbuf * (w_bytes + b_bytes) + _tile_bytes(TM)
        vmem_limit = min(max(int(need * 1.25) + 2 * 1024 * 1024,
                             32 * 1024 * 1024), vmem_cap)

        return pl.pallas_call(
            _pale_mapping_kernel,
            out_shape=jax.ShapeDtypeStruct((B, Dp), out_dtype),
            grid_spec=pltpu.PrefetchScalarGridSpec(
                num_scalar_prefetch=0,
                grid=(grid,),
                in_specs=[
                    pl.BlockSpec((TM, D), lambda i: (i, 0)),   # x: streamed
                    w_spec,                                    # weight: resident
                    b_spec,                                    # bias: resident
                ],
                out_specs=pl.BlockSpec((TM, Dp), lambda i: (i, 0)),
            ),
            compiler_params=pltpu.CompilerParams(
                dimension_semantics=("parallel",),             # rows independent
                vmem_limit_bytes=vmem_limit,
            ),
            cost_estimate=cost,
        )

    try:
        out_p = _build(True)(source_feats, w_t, b_r)
    except Exception:
        # Fallback for JAX versions without single-buffer pipeline_mode support.
        out_p = _build(False)(source_feats, w_t, b_r)

    if Dp != D:
        out_p = out_p[:, :D]
    return out_p


def reference_forward(source_feats, weight, bias):
    y = source_feats @ weight.T + bias
    norm = jnp.maximum(jnp.linalg.norm(y, axis=1, keepdims=True), 1e-12)
    return y / norm


if __name__ == "__main__":
    # Small shapes consistent with the module: batch=8, embedding_dim=32.
    B, D = 8, 32
    key = jax.random.PRNGKey(0)
    kx, kw, kb = jax.random.split(key, 3)

    source_feats = jax.random.normal(kx, (B, D), dtype=jnp.float32)

    # Deterministic nn.Linear-style init: U(-1/sqrt(D), 1/sqrt(D))
    bound = 1.0 / (D ** 0.5)
    weight = jax.random.uniform(kw, (D, D), dtype=jnp.float32, minval=-bound, maxval=bound)
    bias = jax.random.uniform(kb, (D,), dtype=jnp.float32, minval=-bound, maxval=bound)

    out = pale_mapping_linear_forward(source_feats, weight, bias)
    out = jax.block_until_ready(out)

    ref = reference_forward(source_feats, weight, bias)
    assert out.shape == (B, D)
    assert jnp.allclose(out, ref, atol=1e-5, rtol=1e-5), "mismatch vs reference"

    print("KERNEL_OK")
</pallas_src>

<mosaic_0001>
module attributes {stable_mosaic.version = 11 : i64} {
  func.func @_pale_mapping_kernel(%arg0: i32, %arg1: memref<8x32xf32, #tpu.memory_space<vmem>>, %arg2: memref<32x128xf32, #tpu.memory_space<vmem>>, %arg3: memref<1x128xf32, #tpu.memory_space<vmem>>, %arg4: memref<8x128xf32, #tpu.memory_space<vmem>>) attributes {dimension_semantics = [#tpu.dimension_semantics<parallel>], iteration_bounds = array<i64: 1>, scalar_prefetch = 0 : i64, scratch_operands = 0 : i64, tpu.core_type = #tpu.core_type<tc>, window_params = [{transform_indices = @transform_0, window_bounds = array<i64: 8, 32>}, {pipeline_mode = #tpu.pipeline_mode<synchronous>, transform_indices = @transform_1, window_bounds = array<i64: 32, 128>}, {pipeline_mode = #tpu.pipeline_mode<synchronous>, transform_indices = @transform_2, window_bounds = array<i64: 1, 128>}, {transform_indices = @transform_3, window_bounds = array<i64: 8, 128>}]} {
    %c0 = arith.constant 0 : index
    %c0_0 = arith.constant 0 : index
    %0 = vector.load %arg1[%c0, %c0_0] : memref<8x32xf32, #tpu.memory_space<vmem>>, vector<8x32xf32>
    %c0_1 = arith.constant 0 : index
    %c0_2 = arith.constant 0 : index
    %1 = vector.load %arg2[%c0_1, %c0_2] : memref<32x128xf32, #tpu.memory_space<vmem>>, vector<32x128xf32>
    %cst = arith.constant dense<0.000000e+00> : vector<8x128xf32>
    %2 = tpu.matmul %0, %1, %cst {dimension_numbers = #tpu.dot_dimension_numbers<[1], [0], [0], [1], [0, 0, 1, 1], [], []>} : vector<8x32xf32>, vector<32x128xf32>, vector<8x128xf32> -> vector<8x128xf32>
    %c0_3 = arith.constant 0 : index
    %c0_4 = arith.constant 0 : index
    %3 = vector.load %arg3[%c0_3, %c0_4] : memref<1x128xf32, #tpu.memory_space<vmem>>, vector<1x128xf32>
    %4 = vector.broadcast %3 : vector<1x128xf32> to vector<8x128xf32>
    %5 = arith.addf %2, %4 : vector<8x128xf32>
    %6 = arith.mulf %5, %5 : vector<8x128xf32>
    %cst_5 = arith.constant dense<0.000000e+00> : vector<8xf32>
    %7 = vector.multi_reduction <add>, %6, %cst_5 [1] : vector<8x128xf32> to vector<8xf32>
    %8 = vector.shape_cast %7 : vector<8xf32> to vector<8x1xf32>
    %cst_6 = arith.constant 1.000000e-24 : f32
    %9 = vector.broadcast %cst_6 : f32 to vector<8x1xf32>
    %10 = arith.maximumf %8, %9 : vector<8x1xf32>
    %11 = math.rsqrt %10 : vector<8x1xf32>
    %12 = vector.broadcast %11 : vector<8x1xf32> to vector<8x128xf32>
    %13 = arith.mulf %5, %12 : vector<8x128xf32>
    %c0_7 = arith.constant 0 : index
    %c0_8 = arith.constant 0 : index
    %14 = vector.load %arg4[%c0_7, %c0_8] : memref<8x128xf32, #tpu.memory_space<vmem>>, vector<8x128xf32>
    tpu.vector_store %arg4[%c0_7, %c0_8], %13 {strides = array<i32>} : memref<8x128xf32, #tpu.memory_space<vmem>>, vector<8x128xf32>,
    return
  }
  func.func @transform_0(%arg0: i32) -> (i32, i32) {
    %c0_i32 = arith.constant 0 : i32
    %c0_i32_0 = arith.constant 0 : i32
    return %arg0, %c0_i32 : i32, i32
  }
  func.func @transform_1(%arg0: i32) -> (i32, i32) {
    %c0_i32 = arith.constant 0 : i32
    %c0_i32_0 = arith.constant 0 : i32
    %c0_i32_1 = arith.constant 0 : i32
    return %c0_i32, %c0_i32_0 : i32, i32
  }
  func.func @transform_2(%arg0: i32) -> (i32, i32) {
    %c0_i32 = arith.constant 0 : i32
    %c0_i32_0 = arith.constant 0 : i32
    %c0_i32_1 = arith.constant 0 : i32
    return %c0_i32, %c0_i32_0 : i32, i32
  }
  func.func @transform_3(%arg0: i32) -> (i32, i32) {
    %c0_i32 = arith.constant 0 : i32
    %c0_i32_0 = arith.constant 0 : i32
    return %arg0, %c0_i32 : i32, i32
  }
}

module attributes {stable_mosaic.version = 11 : i64} {
  func.func @_pale_mapping_kernel(%arg0: i32, %arg1: memref<8x32xf32, #tpu.memory_space<vmem>>, %arg2: memref<32x128xf32, #tpu.memory_space<vmem>>, %arg3: memref<1x128xf32, #tpu.memory_space<vmem>>, %arg4: memref<8x128xf32, #tpu.memory_space<vmem>>) attributes {dimension_semantics = [#tpu.dimension_semantics<parallel>], iteration_bounds = array<i64: 1>, scalar_prefetch = 0 : i64, scratch_operands = 0 : i64, tpu.core_type = #tpu.core_type<tc>, window_params = [{transform_indices = @transform_0, window_bounds = array<i64: 8, 32>}, {pipeline_mode = #tpu.pipeline_mode<synchronous>, transform_indices = @transform_1, window_bounds = array<i64: 32, 128>}, {pipeline_mode = #tpu.pipeline_mode<synchronous>, transform_indices = @transform_2, window_bounds = array<i64: 1, 128>}, {transform_indices = @transform_3, window_bounds = array<i64: 8, 128>}]} {
    %c0 = arith.constant 0 : index
    %c0_0 = arith.constant 0 : index
    %0 = vector.load %arg1[%c0, %c0_0] : memref<8x32xf32, #tpu.memory_space<vmem>>, vector<8x32xf32>
    %c0_1 = arith.constant 0 : index
    %c0_2 = arith.constant 0 : index
    %1 = vector.load %arg2[%c0_1, %c0_2] : memref<32x128xf32, #tpu.memory_space<vmem>>, vector<32x128xf32>
    %cst = arith.constant dense<0.000000e+00> : vector<8x128xf32>
    %2 = tpu.matmul %0, %1, %cst {dimension_numbers = #tpu.dot_dimension_numbers<[1], [0], [0], [1], [0, 0, 1, 1], [], []>} : vector<8x32xf32>, vector<32x128xf32>, vector<8x128xf32> -> vector<8x128xf32>
    %c0_3 = arith.constant 0 : index
    %c0_4 = arith.constant 0 : index
    %3 = vector.load %arg3[%c0_3, %c0_4] : memref<1x128xf32, #tpu.memory_space<vmem>>, vector<1x128xf32>
    %4 = vector.broadcast %3 : vector<1x128xf32> to vector<8x128xf32>
    %5 = arith.addf %2, %4 : vector<8x128xf32>
    %6 = arith.mulf %5, %5 : vector<8x128xf32>
    %cst_5 = arith.constant dense<0.000000e+00> : vector<8xf32>
    %7 = vector.multi_reduction <add>, %6, %cst_5 [1] : vector<8x128xf32> to vector<8xf32>
    %8 = vector.shape_cast %7 : vector<8xf32> to vector<8x1xf32>
    %cst_6 = arith.constant 1.000000e-24 : f32
    %9 = vector.broadcast %cst_6 : f32 to vector<8x1xf32>
    %10 = arith.maximumf %8, %9 : vector<8x1xf32>
    %11 = math.rsqrt %10 : vector<8x1xf32>
    %12 = vector.broadcast %11 : vector<8x1xf32> to vector<8x128xf32>
    %13 = arith.mulf %5, %12 : vector<8x128xf32>
    %c0_7 = arith.constant 0 : index
    %c0_8 = arith.constant 0 : index
    %14 = vector.load %arg4[%c0_7, %c0_8] : memref<8x128xf32, #tpu.memory_space<vmem>>, vector<8x128xf32>
    tpu.vector_store %arg4[%c0_7, %c0_8], %13 {strides = array<i32>} : memref<8x128xf32, #tpu.memory_space<vmem>>, vector<8x128xf32>,
    return
  }
  func.func @transform_0(%arg0: i32) -> (i32, i32) {
    %c0_i32 = arith.constant 0 : i32
    %c0_i32_0 = arith.constant 0 : i32
    return %arg0, %c0_i32 : i32, i32
  }
  func.func @transform_1(%arg0: i32) -> (i32, i32) {
    %c0_i32 = arith.constant 0 : i32
    %c0_i32_0 = arith.constant 0 : i32
    %c0_i32_1 = arith.constant 0 : i32
    return %c0_i32, %c0_i32_0 : i32, i32
  }
  func.func @transform_2(%arg0: i32) -> (i32, i32) {
    %c0_i32 = arith.constant 0 : i32
    %c0_i32_0 = arith.constant 0 : i32
    %c0_i32_1 = arith.constant 0 : i32
    return %c0_i32, %c0_i32_0 : i32, i32
  }
  func.func @transform_3(%arg0: i32) -> (i32, i32) {
    %c0_i32 = arith.constant 0 : i32
    %c0_i32_0 = arith.constant 0 : i32
    return %arg0, %c0_i32 : i32, i32
  }
}

</mosaic_0001>

<llo_original>
// kernel: tpu_custom_call.1
$region0: #{tpu_custom_call.1}
  #allocation0 [shape = 'u32[]', space=smem, size = 0x4, offset = 0x4, fixed_abs, tag = 'smem constant byte address 0x4 - core index']
  #allocation1 [shape = 'u32[144,128]{1,0:T(1,128)}', space=vmem, size = 0x12000, scoped, tag = 'internal scratch']
  %s0 = inlined_call_operand.hbm [shape: f32[8,32], index: 0, kind: input, shape index: {}]
  %s1 = inlined_call_operand.hbm [shape: f32[32,128], index: 1, kind: input, shape index: {}]
  %s2 = inlined_call_operand.vmem [shape: f32[1,128], index: 2, kind: input, shape index: {}]
  %s3 = inlined_call_operand.hbm [shape: f32[8,128], index: 3, kind: output, shape index: {}]
  %s4 = sld [smem:[#allocation0]]
  $region30: #{tpu_custom_call.1} parent=0
    _
  %s6 = ssub.s32 1, %s4
  %s7 = scalar_select 0, %s6, %s4
  $region1: #{tpu_custom_call.1} parent=0
    #allocation2 [shape = 'u8[4096]{0}', space=vmem, size = 0x1000, scoped, tag = 'input window, operand 0, single buffered']
    #allocation3 [shape = 's32[1]{0}', space=sflag, size = 0x4, scoped, tag = 'scoped memory for tpu_custom_call.1']
    #allocation4 [shape = 's32[1]{0}', space=sflag, size = 0x4, scoped, tag = 'scoped memory for tpu_custom_call.1']
    #allocation5 [shape = 'u8[16384]{0}', space=vmem, size = 0x4000, scoped, tag = 'input window, operand 1, single buffered']
    #allocation6 [shape = 's32[1]{0}', space=sflag, size = 0x4, scoped, tag = 'scoped memory for tpu_custom_call.1']
    #allocation7 [shape = 'u8[4096]{0}', space=vmem, size = 0x1000, scoped, tag = 'output window, operand 0, single buffered']
    %8 = vsyncpa [#allocation3], 0
    %9 = vsyncpa [#allocation6], 0
    %10 = vsyncpa [#allocation4], 0
    // Predicated region
    $region2: #{tpu_custom_call.1} parent=1 // pred_check
      _
    $region3: #{tpu_custom_call.1} parent=1 // pred_check_branch
      %12 = sbr.rel (0) target = $region5
    $region4: #{tpu_custom_call.1} parent=1 // pred_region
      %s14 = ssub.s32 128, 128
      %15 = vsyncadd [#allocation3], %s14
      %s17 = sshll.u32 [#allocation2], 4
      %s18 = int_to_ptr.vmem [resolvable:$true] %s17
      %20 = dma.hbm_to_vmem [thread:$0]  %s0, 128, %s18, [#allocation3]
    $region5: #{tpu_custom_call.1} parent=1 // pred_fallthru
      _
    // Predicated region
    $region6: #{tpu_custom_call.1} parent=1 // pred_check
      _
    $region7: #{tpu_custom_call.1} parent=1 // pred_check_branch
      %22 = sbr.rel (0) target = $region9
    $region8: #{tpu_custom_call.1} parent=1 // pred_region
      %s24 = ssub.s32 512, 512
      %25 = vsyncadd [#allocation6], %s24
      %s26 = sshll.u32 [#allocation5], 4
      %s27 = int_to_ptr.vmem [resolvable:$true] %s26
      %32 = dma.hbm_to_vmem [thread:$0]  %s1, 512, %s27, [#allocation6], 128, 128, 8
    $region9: #{tpu_custom_call.1} parent=1 // pred_fallthru
      _
    // Predicated region
    $region10: #{tpu_custom_call.1} parent=1 // pred_check
      _
    $region11: #{tpu_custom_call.1} parent=1 // pred_check_branch
      %34 = sbr.rel (0) target = $region13
    $region12: #{tpu_custom_call.1} parent=1 // pred_region
      _
    $region13: #{tpu_custom_call.1} parent=1 // pred_fallthru
      _
    // Predicated region
    $region14: #{tpu_custom_call.1} parent=1 // pred_check
      _
    $region15: #{tpu_custom_call.1} parent=1 // pred_check_branch
      %36 = sbr.rel (0) target = $region17
    $region16: #{tpu_custom_call.1} parent=1 // pred_region
      %37 = dma.done [#allocation3], 128
    $region17: #{tpu_custom_call.1} parent=1 // pred_fallthru
      _
    // Predicated region
    $region18: #{tpu_custom_call.1} parent=1 // pred_check
      _
    $region19: #{tpu_custom_call.1} parent=1 // pred_check_branch
      %39 = sbr.rel (0) target = $region21
    $region20: #{tpu_custom_call.1} parent=1 // pred_region
      %40 = dma.done [#allocation6], 512
    $region21: #{tpu_custom_call.1} parent=1 // pred_fallthru
      _
    %v41 = vld [vmem:[#allocation2] sm:$0xff]
    %v42 = vld [vmem:[#allocation5] sm:$0xff]
    %v43 = vld [vmem:[#allocation5 + $0x8] sm:$0xff]
    %v44 = vld [vmem:[#allocation5 + $0x10] sm:$0xff]
    %v45 = vld [vmem:[#allocation5 + $0x18] sm:$0xff]
    %v46 = vld [vmem:[%s2] sm:$0x1]
    %v48 = vlaneseq
    %v49 = vshrl.u32 %v48, 7
    %v50 = vsub.s32 0, %v49
    %v51 = vrot.slane %v46, %v50
    %vm53 = vcmask 261120
    %v55 = vsel %vm53, %v41, 0
    %57 = vmatprep.subr.mxu0 0.0
    %58 = vmatpush1.msra.mxu0 %v42
    %59 = vmatprep.subr.mxu0 0.0
    %60 = vmatpush1.msra.mxu0 %v43
    %61 = vmatprep.subr.mxu0 0.0
    %62 = vmatpush1.msra.mxu0 %v44
    %63 = vmatprep.subr.mxu0 0.0
    %64 = vmatpush1.msra.mxu0 %v45
    %65 = vmatprep.subr.mxu0 0.0
    %66 = vmatpush1.msra.mxu0 0.0
    %67 = vmatprep.subr.mxu0 0.0
    %68 = vmatpush1.msra.mxu0 0.0
    %69 = vmatprep.subr.mxu0 0.0
    %70 = vmatpush1.msra.mxu0 0.0
    %71 = vmatprep.subr.mxu0 0.0
    %72 = vmatpush1.msra.mxu0 0.0
    %73 = vmatprep.subr.mxu0 0.0
    %74 = vmatpush1.msra.mxu0 0.0
    %75 = vmatprep.subr.mxu0 0.0
    %76 = vmatpush1.msra.mxu0 0.0
    %77 = vmatprep.subr.mxu0 0.0
    %78 = vmatpush1.msra.mxu0 0.0
    %79 = vmatprep.subr.mxu0 0.0
    %80 = vmatpush1.msra.mxu0 0.0
    %81 = vmatprep.subr.mxu0 0.0
    %82 = vmatpush1.msra.mxu0 0.0
    %83 = vmatprep.subr.mxu0 0.0
    %84 = vmatpush1.msra.mxu0 0.0
    %85 = vmatprep.subr.mxu0 0.0
    %86 = vmatpush1.msra.mxu0 0.0
    %87 = vmatprep.subr.mxu0 0.0
    %88 = vmatpush1.msra.mxu0 0.0
    %89 = vmatprep.subr.mxu0 0.0
    %90 = vmatpush1.msra.mxu0 0.0
    %91 = vmatprep.subr.mxu0 0.0
    %92 = vmatpush1.msra.mxu0 0.0
    %93 = vmatprep.subr.mxu0 0.0
    %94 = vmatpush1.msra.mxu0 0.0
    %95 = vmatprep.subr.mxu0 0.0
    %96 = vmatpush1.msra.mxu0 0.0
    %97 = vmatprep.subr.mxu0 0.0
    %98 = vmatpush1.msra.mxu0 0.0
    %99 = vmatprep.subr.mxu0 0.0
    %100 = vmatpush1.msra.mxu0 0.0
    %101 = vmatprep.subr.mxu0 0.0
    %102 = vmatpush1.msra.mxu0 0.0
    %103 = vmatprep.subr.mxu0 0.0
    %104 = vmatpush1.msra.mxu0 0.0
    %105 = vmatprep.subr.mxu0 0.0
    %106 = vmatpush1.msra.mxu0 0.0
    %107 = vmatprep.subr.mxu0 0.0
    %108 = vmatpush1.msra.mxu0 0.0
    %109 = vmatprep.subr.mxu0 0.0
    %110 = vmatpush1.msra.mxu0 0.0
    %111 = vmatprep.subr.mxu0 0.0
    %112 = vmatpush1.msra.mxu0 0.0
    %113 = vmatprep.subr.mxu0 0.0
    %114 = vmatpush1.msra.mxu0 0.0
    %115 = vmatprep.subr.mxu0 0.0
    %116 = vmatpush1.msra.mxu0 0.0
    %117 = vmatprep.subr.mxu0 0.0
    %118 = vmatpush1.msra.mxu0 0.0
    %119 = vmatprep.subr.mxu0 0.0
    %120 = vmatpush1.msra.mxu0 0.0
    %121 = vmatprep.mubr.f32.mxu0 0.0
    %122 = vmatmul.mubr.f32.gmra.mrb[0].mxu0 %v55
    %v123 = vpop.f32.mrb[0].mxu0
    %v124 = vadd.f32 %v51, %v123
    %v125 = vpop.f32.mrb[0].mxu0
    %126 = vdwg.mxu0
    %v127 = vmul.f32 %v124, %v124
    %128 = vadd.xlane.f32.xlu0 %v127
    %v129 = vpop.xlane.xlu0 %128
    %v130 = vmax.f32 %v129, 1e-24
    %v131 = vrsqrt.pop %v130
    %v132 = vmul.f32 %v124, %v131
    %133 = vst [vmem:[#allocation7] sm:$0xff] %v132
    // Predicated region
    $region22: #{tpu_custom_call.1} parent=1 // pred_check
      _
    $region23: #{tpu_custom_call.1} parent=1 // pred_check_branch
      %135 = sbr.rel (0) target = $region25
    $region24: #{tpu_custom_call.1} parent=1 // pred_region
      %s137 = ssub.s32 128, 128
      %138 = vsyncadd [#allocation4], %s137
      %s140 = sshll.u32 [#allocation7], 4
      %s141 = int_to_ptr.vmem [resolvable:$true] %s140
      %143 = dma.vmem_to_hbm [thread:$0]  %s141, 128, %s3, [#allocation4]
    $region25: #{tpu_custom_call.1} parent=1 // pred_fallthru
      _
    // Predicated region
    $region26: #{tpu_custom_call.1} parent=1 // pred_check
      _
    $region27: #{tpu_custom_call.1} parent=1 // pred_check_branch
      %145 = sbr.rel (0) target = $region29
    $region28: #{tpu_custom_call.1} parent=1 // pred_region
      %146 = dma.done [#allocation4], 128
    $region29: #{tpu_custom_call.1} parent=1 // pred_fallthru
      _
    %147 = vsyncpa [#allocation3], 1
    %148 = vsyncpa [#allocation6], 1
    %149 = vsyncpa [#allocation4], 1

// kernel: tpu_custom_call.1
$region0: #{tpu_custom_call.1}
  #allocation0 [shape = 'u32[]', space=smem, size = 0x4, offset = 0x4, fixed_abs, tag = 'smem constant byte address 0x4 - core index']
  #allocation1 [shape = 'u32[144,128]{1,0:T(1,128)}', space=vmem, size = 0x12000, scoped, tag = 'internal scratch']
  %s0 = inlined_call_operand.hbm [shape: f32[8,32], index: 0, kind: input, shape index: {}]
  %s1 = inlined_call_operand.hbm [shape: f32[32,128], index: 1, kind: input, shape index: {}]
  %s2 = inlined_call_operand.vmem [shape: f32[1,128], index: 2, kind: input, shape index: {}]
  %s3 = inlined_call_operand.hbm [shape: f32[8,128], index: 3, kind: output, shape index: {}]
  %s4 = sld [smem:[#allocation0]]
  $region30: #{tpu_custom_call.1} parent=0
    _
  %s6 = ssub.s32 1, %s4
  %s7 = scalar_select 0, %s6, %s4
  $region1: #{tpu_custom_call.1} parent=0
    #allocation2 [shape = 'u8[4096]{0}', space=vmem, size = 0x1000, scoped, tag = 'input window, operand 0, single buffered']
    #allocation3 [shape = 's32[1]{0}', space=sflag, size = 0x4, scoped, tag = 'scoped memory for tpu_custom_call.1']
    #allocation4 [shape = 's32[1]{0}', space=sflag, size = 0x4, scoped, tag = 'scoped memory for tpu_custom_call.1']
    #allocation5 [shape = 'u8[16384]{0}', space=vmem, size = 0x4000, scoped, tag = 'input window, operand 1, single buffered']
    #allocation6 [shape = 's32[1]{0}', space=sflag, size = 0x4, scoped, tag = 'scoped memory for tpu_custom_call.1']
    #allocation7 [shape = 'u8[4096]{0}', space=vmem, size = 0x1000, scoped, tag = 'output window, operand 0, single buffered']
    %8 = vsyncpa [#allocation3], 0
    %9 = vsyncpa [#allocation6], 0
    %10 = vsyncpa [#allocation4], 0
    // Predicated region
    $region2: #{tpu_custom_call.1} parent=1 // pred_check
      _
    $region3: #{tpu_custom_call.1} parent=1 // pred_check_branch
      %12 = sbr.rel (0) target = $region5
    $region4: #{tpu_custom_call.1} parent=1 // pred_region
      %s14 = ssub.s32 128, 128
      %15 = vsyncadd [#allocation3], %s14
      %s17 = sshll.u32 [#allocation2], 4
      %s18 = int_to_ptr.vmem [resolvable:$true] %s17
      %20 = dma.hbm_to_vmem [thread:$0]  %s0, 128, %s18, [#allocation3]
    $region5: #{tpu_custom_call.1} parent=1 // pred_fallthru
      _
    // Predicated region
    $region6: #{tpu_custom_call.1} parent=1 // pred_check
      _
    $region7: #{tpu_custom_call.1} parent=1 // pred_check_branch
      %22 = sbr.rel (0) target = $region9
    $region8: #{tpu_custom_call.1} parent=1 // pred_region
      %s24 = ssub.s32 512, 512
      %25 = vsyncadd [#allocation6], %s24
      %s26 = sshll.u32 [#allocation5], 4
      %s27 = int_to_ptr.vmem [resolvable:$true] %s26
      %32 = dma.hbm_to_vmem [thread:$0]  %s1, 512, %s27, [#allocation6], 128, 128, 8
    $region9: #{tpu_custom_call.1} parent=1 // pred_fallthru
      _
    // Predicated region
    $region10: #{tpu_custom_call.1} parent=1 // pred_check
      _
    $region11: #{tpu_custom_call.1} parent=1 // pred_check_branch
      %34 = sbr.rel (0) target = $region13
    $region12: #{tpu_custom_call.1} parent=1 // pred_region
      _
    $region13: #{tpu_custom_call.1} parent=1 // pred_fallthru
      _
    // Predicated region
    $region14: #{tpu_custom_call.1} parent=1 // pred_check
      _
    $region15: #{tpu_custom_call.1} parent=1 // pred_check_branch
      %36 = sbr.rel (0) target = $region17
    $region16: #{tpu_custom_call.1} parent=1 // pred_region
      %37 = dma.done [#allocation3], 128
    $region17: #{tpu_custom_call.1} parent=1 // pred_fallthru
      _
    // Predicated region
    $region18: #{tpu_custom_call.1} parent=1 // pred_check
      _
    $region19: #{tpu_custom_call.1} parent=1 // pred_check_branch
      %39 = sbr.rel (0) target = $region21
    $region20: #{tpu_custom_call.1} parent=1 // pred_region
      %40 = dma.done [#allocation6], 512
    $region21: #{tpu_custom_call.1} parent=1 // pred_fallthru
      _
    %v41 = vld [vmem:[#allocation2] sm:$0xff]
    %v42 = vld [vmem:[#allocation5] sm:$0xff]
    %v43 = vld [vmem:[#allocation5 + $0x8] sm:$0xff]
    %v44 = vld [vmem:[#allocation5 + $0x10] sm:$0xff]
    %v45 = vld [vmem:[#allocation5 + $0x18] sm:$0xff]
    %v46 = vld [vmem:[%s2] sm:$0x1]
    %v48 = vlaneseq
    %v49 = vshrl.u32 %v48, 7
    %v50 = vsub.s32 0, %v49
    %v51 = vrot.slane %v46, %v50
    %vm53 = vcmask 261120
    %v55 = vsel %vm53, %v41, 0
    %57 = vmatprep.subr.mxu0 0.0
    %58 = vmatpush1.msra.mxu0 %v42
    %59 = vmatprep.subr.mxu0 0.0
    %60 = vmatpush1.msra.mxu0 %v43
    %61 = vmatprep.subr.mxu0 0.0
    %62 = vmatpush1.msra.mxu0 %v44
    %63 = vmatprep.subr.mxu0 0.0
    %64 = vmatpush1.msra.mxu0 %v45
    %65 = vmatprep.subr.mxu0 0.0
    %66 = vmatpush1.msra.mxu0 0.0
    %67 = vmatprep.subr.mxu0 0.0
    %68 = vmatpush1.msra.mxu0 0.0
    %69 = vmatprep.subr.mxu0 0.0
    %70 = vmatpush1.msra.mxu0 0.0
    %71 = vmatprep.subr.mxu0 0.0
    %72 = vmatpush1.msra.mxu0 0.0
    %73 = vmatprep.subr.mxu0 0.0
    %74 = vmatpush1.msra.mxu0 0.0
    %75 = vmatprep.subr.mxu0 0.0
    %76 = vmatpush1.msra.mxu0 0.0
    %77 = vmatprep.subr.mxu0 0.0
    %78 = vmatpush1.msra.mxu0 0.0
    %79 = vmatprep.subr.mxu0 0.0
    %80 = vmatpush1.msra.mxu0 0.0
    %81 = vmatprep.subr.mxu0 0.0
    %82 = vmatpush1.msra.mxu0 0.0
    %83 = vmatprep.subr.mxu0 0.0
    %84 = vmatpush1.msra.mxu0 0.0
    %85 = vmatprep.subr.mxu0 0.0
    %86 = vmatpush1.msra.mxu0 0.0
    %87 = vmatprep.subr.mxu0 0.0
    %88 = vmatpush1.msra.mxu0 0.0
    %89 = vmatprep.subr.mxu0 0.0
    %90 = vmatpush1.msra.mxu0 0.0
    %91 = vmatprep.subr.mxu0 0.0
    %92 = vmatpush1.msra.mxu0 0.0
    %93 = vmatprep.subr.mxu0 0.0
    %94 = vmatpush1.msra.mxu0 0.0
    %95 = vmatprep.subr.mxu0 0.0
    %96 = vmatpush1.msra.mxu0 0.0
    %97 = vmatprep.subr.mxu0 0.0
    %98 = vmatpush1.msra.mxu0 0.0
    %99 = vmatprep.subr.mxu0 0.0
    %100 = vmatpush1.msra.mxu0 0.0
    %101 = vmatprep.subr.mxu0 0.0
    %102 = vmatpush1.msra.mxu0 0.0
    %103 = vmatprep.subr.mxu0 0.0
    %104 = vmatpush1.msra.mxu0 0.0
    %105 = vmatprep.subr.mxu0 0.0
    %106 = vmatpush1.msra.mxu0 0.0
    %107 = vmatprep.subr.mxu0 0.0
    %108 = vmatpush1.msra.mxu0 0.0
    %109 = vmatprep.subr.mxu0 0.0
    %110 = vmatpush1.msra.mxu0 0.0
    %111 = vmatprep.subr.mxu0 0.0
    %112 = vmatpush1.msra.mxu0 0.0
    %113 = vmatprep.subr.mxu0 0.0
    %114 = vmatpush1.msra.mxu0 0.0
    %115 = vmatprep.subr.mxu0 0.0
    %116 = vmatpush1.msra.mxu0 0.0
    %117 = vmatprep.subr.mxu0 0.0
    %118 = vmatpush1.msra.mxu0 0.0
    %119 = vmatprep.subr.mxu0 0.0
    %120 = vmatpush1.msra.mxu0 0.0
    %121 = vmatprep.mubr.f32.mxu0 0.0
    %122 = vmatmul.mubr.f32.gmra.mrb[0].mxu0 %v55
    %v123 = vpop.f32.mrb[0].mxu0
    %v124 = vadd.f32 %v51, %v123
    %v125 = vpop.f32.mrb[0].mxu0
    %126 = vdwg.mxu0
    %v127 = vmul.f32 %v124, %v124
    %128 = vadd.xlane.f32.xlu0 %v127
    %v129 = vpop.xlane.xlu0 %128
    %v130 = vmax.f32 %v129, 1e-24
    %v131 = vrsqrt.pop %v130
    %v132 = vmul.f32 %v124, %v131
    %133 = vst [vmem:[#allocation7] sm:$0xff] %v132
    // Predicated region
    $region22: #{tpu_custom_call.1} parent=1 // pred_check
      _
    $region23: #{tpu_custom_call.1} parent=1 // pred_check_branch
      %135 = sbr.rel (0) target = $region25
    $region24: #{tpu_custom_call.1} parent=1 // pred_region
      %s137 = ssub.s32 128, 128
      %138 = vsyncadd [#allocation4], %s137
      %s140 = sshll.u32 [#allocation7], 4
      %s141 = int_to_ptr.vmem [resolvable:$true] %s140
      %143 = dma.vmem_to_hbm [thread:$0]  %s141, 128, %s3, [#allocation4]
    $region25: #{tpu_custom_call.1} parent=1 // pred_fallthru
      _
    // Predicated region
    $region26: #{tpu_custom_call.1} parent=1 // pred_check
      _
    $region27: #{tpu_custom_call.1} parent=1 // pred_check_branch
      %145 = sbr.rel (0) target = $region29
    $region28: #{tpu_custom_call.1} parent=1 // pred_region
      %146 = dma.done [#allocation4], 128
    $region29: #{tpu_custom_call.1} parent=1 // pred_fallthru
      _
    %147 = vsyncpa [#allocation3], 1
    %148 = vsyncpa [#allocation6], 1
    %149 = vsyncpa [#allocation4], 1

</llo_original>
